<compile_context>
chip_gen: v6e
topology: v6e:2x2x1
jax: 0.10.0
libtpu: 0.0.40
codegen_flags: <defaults>
</compile_context>

<pallas_src>
import functools

import jax
import jax.numpy as jnp
from jax.experimental import pallas as pl
from jax.experimental.pallas import tpu as pltpu


def _round_up(x, m):
    return (x + m - 1) // m * m


def _start_row_gather(ids_ref, w_hbm, rows, sems, blk, slot):
    """Issue one row DMA per token of block `blk` into rows[slot]."""
    tn = rows.shape[1]
    base = blk * tn

    @pl.loop(0, tn)
    def _(r):
        tok = ids_ref[base + r]
        pltpu.make_async_copy(
            w_hbm.at[pl.ds(tok, 1), :],          # (1, H) row in HBM
            rows.at[slot, pl.ds(r, 1), :],       # (1, H) row in VMEM scratch
            sems.at[slot],
        ).start()


def _wait_row_gather(rows, sems, slot):
    # All tn row copies signal sems[slot]; a single wait sized as the full
    # (tn, H) slab consumes exactly the same number of bytes.
    pltpu.make_async_copy(rows.at[slot], rows.at[slot], sems.at[slot]).wait()


def _embed_kernel(ids_ref, w_hbm, o_ref, rows, sems):
    i = pl.program_id(0)
    nblk = pl.num_programs(0)
    slot = i % 2

    @pl.when(i == 0)
    def _():
        _start_row_gather(ids_ref, w_hbm, rows, sems, 0, 0)

    @pl.when(i + 1 < nblk)
    def _():
        _start_row_gather(ids_ref, w_hbm, rows, sems, i + 1, (i + 1) % 2)

    _wait_row_gather(rows, sems, slot)
    o_ref[...] = rows[slot].astype(o_ref.dtype)


def _embed_tt_kernel(ids_ref, tt_ids_ref, w_hbm, tt_w_ref, o_ref, rows, sems):
    i = pl.program_id(0)
    nblk = pl.num_programs(0)
    slot = i % 2

    @pl.when(i == 0)
    def _():
        _start_row_gather(ids_ref, w_hbm, rows, sems, 0, 0)

    @pl.when(i + 1 < nblk)
    def _():
        _start_row_gather(ids_ref, w_hbm, rows, sems, i + 1, (i + 1) % 2)

    _wait_row_gather(rows, sems, slot)

    x = rows[slot].astype(jnp.float32)           # (tn, H)
    tt_ids = tt_ids_ref[...]                     # (tn, 1) int32
    n_tokentypes = tt_w_ref.shape[0]
    # T is tiny: VPU broadcast-select adds, no extra MXU pass.
    for t in range(n_tokentypes):
        row_t = tt_w_ref[pl.ds(t, 1), :].astype(jnp.float32)   # (1, H)
        x = x + jnp.where(tt_ids == t, row_t, 0.0)
    o_ref[...] = x.astype(o_ref.dtype)


@functools.partial(jax.jit, static_argnames=("tn",))
def glm_embedding_1d(input_ids, word_weight, tokentype_ids=None,
                     tokentype_weight=None, tn=256):
    """Pallas implementation of glm_Embedding1D.forward."""
    B, S = input_ids.shape
    V, H = word_weight.shape
    out_dtype = word_weight.dtype
    N = B * S

    # Lane-dense stores / row DMAs: pad hidden dim to a multiple of 128.
    H_pad = _round_up(H, 128)
    if H_pad != H:
        word_weight = jnp.pad(word_weight, ((0, 0), (0, H_pad - H)))
        if tokentype_weight is not None:
            tokentype_weight = jnp.pad(tokentype_weight,
                                       ((0, 0), (0, H_pad - H)))

    # Row tile: big enough to amortize grid-step overhead, capped at B*S.
    tn = _round_up(max(tn, 8), 8)
    tn_eff = min(tn, _round_up(N, 8))
    N_pad = _round_up(N, tn_eff)

    ids_flat = input_ids.reshape(N).astype(jnp.int32)
    if N_pad != N:
        ids_flat = jnp.pad(ids_flat, (0, N_pad - N))   # pad with id 0 (in range)

    grid = (N_pad // tn_eff,)
    out_shape = jax.ShapeDtypeStruct((N_pad, H_pad), out_dtype)
    out_spec = pl.BlockSpec((tn_eff, H_pad), lambda i, ids: (i, 0))
    w_spec = pl.BlockSpec(memory_space=pl.ANY)   # table stays in HBM
    scratch = [pltpu.VMEM((2, tn_eff, H_pad), word_weight.dtype),
               pltpu.SemaphoreType.DMA((2,))]
    # "arbitrary": the cross-step double buffer (prefetch of block i+1 at
    # step i) requires sequential grid execution on one core.
    cparams = pltpu.CompilerParams(dimension_semantics=("arbitrary",))

    use_tt = tokentype_ids is not None and tokentype_weight is not None
    if use_tt:
        T = tokentype_weight.shape[0]
        tt_flat = tokentype_ids.reshape(N).astype(jnp.int32)
        if N_pad != N:
            tt_flat = jnp.pad(tt_flat, (0, N_pad - N))
        tt_flat = tt_flat.reshape(N_pad, 1)
        out = pl.pallas_call(
            _embed_tt_kernel,
            out_shape=out_shape,
            grid_spec=pltpu.PrefetchScalarGridSpec(
                num_scalar_prefetch=1,
                grid=grid,
                in_specs=[pl.BlockSpec((tn_eff, 1), lambda i, ids: (i, 0)),
                          w_spec,
                          pl.BlockSpec((T, H_pad), lambda i, ids: (0, 0))],
                out_specs=out_spec,
                scratch_shapes=scratch),
            compiler_params=cparams,
        )(ids_flat, tt_flat, word_weight, tokentype_weight)
    else:
        out = pl.pallas_call(
            _embed_kernel,
            out_shape=out_shape,
            grid_spec=pltpu.PrefetchScalarGridSpec(
                num_scalar_prefetch=1,
                grid=grid,
                in_specs=[w_spec],
                out_specs=out_spec,
                scratch_shapes=scratch),
            compiler_params=cparams,
        )(ids_flat, word_weight)

    return out[:N, :H].reshape(B, S, H)


def init_params(key, hidden_size, vocab_size, num_tokentypes, padding_idx=0,
                dtype=jnp.float32):
    """Deterministic synthetic init matching nn.Embedding shapes."""
    k1, k2 = jax.random.split(key)
    word_w = jax.random.normal(k1, (vocab_size, hidden_size), dtype=jnp.float32)
    # nn.Embedding with padding_idx zeroes that row at init.
    word_w = word_w.at[padding_idx].set(0.0).astype(dtype)
    tt_w = None
    if num_tokentypes > 0:
        tt_w = jax.random.normal(
            k2, (num_tokentypes, hidden_size), dtype=jnp.float32).astype(dtype)
    return word_w, tt_w


if __name__ == "__main__":
    hidden_size = 32
    vocab_size = 64
    max_seq_len = 128      # unused in forward (no position embedding applied)
    num_tokentypes = 4
    padding_idx = 0
    B, S = 2, 8

    key = jax.random.PRNGKey(0)
    kw, ki, kt = jax.random.split(key, 3)

    word_w, tt_w = init_params(kw, hidden_size, vocab_size, num_tokentypes,
                               padding_idx=padding_idx, dtype=jnp.float32)

    input_ids = jax.random.randint(ki, (B, S), 0, vocab_size, dtype=jnp.int32)
    tokentype_ids = jax.random.randint(kt, (B, S), 0, num_tokentypes,
                                       dtype=jnp.int32)

    # TODO(synk): position_ids are materialized in the torch forward but never
    # consumed (no position embedding in this module), so they are skipped.

    out = jax.block_until_ready(
        glm_embedding_1d(input_ids, word_w, tokentype_ids, tt_w))

    # Pure-JAX reference (embedding lookup + tokentype add).
    ref = jnp.take(word_w, input_ids, axis=0) + jnp.take(tt_w, tokentype_ids,
                                                         axis=0)
    assert out.shape == (B, S, hidden_size)
    assert jnp.allclose(out, ref, atol=1e-5, rtol=1e-5)

    # Also exercise the no-tokentype path (tokentype_ids=None).
    out2 = jax.block_until_ready(glm_embedding_1d(input_ids, word_w))
    ref2 = jnp.take(word_w, input_ids, axis=0)
    assert jnp.allclose(out2, ref2, atol=1e-5, rtol=1e-5)

    print("KERNEL_OK")
</pallas_src>

<mosaic_0001>
module attributes {stable_mosaic.version = 11 : i64} {
  func.func @_embed_tt_kernel(%arg0: i32, %arg1: memref<16xi32, #tpu.memory_space<smem>>, %arg2: memref<16x1xi32, #tpu.memory_space<vmem>>, %arg3: memref<64x128xf32, #tpu.memory_space<any>>, %arg4: memref<4x128xf32, #tpu.memory_space<vmem>>, %arg5: memref<16x128xf32, #tpu.memory_space<vmem>>, %arg6: memref<2x16x128xf32, #tpu.memory_space<vmem>>, %arg7: memref<2x!tpu.dma_semaphore, #tpu.memory_space<semaphore_mem>>) attributes {dimension_semantics = [#tpu.dimension_semantics<arbitrary>], iteration_bounds = array<i64: 1>, scalar_prefetch = 1 : i64, scratch_operands = 2 : i64, tpu.core_type = #tpu.core_type<tc>, window_params = [{transform_indices = @transform_0, window_bounds = array<i64: 16, 1>}, {}, {pipeline_mode = #tpu.pipeline_mode<synchronous>, transform_indices = @transform_2, window_bounds = array<i64: 4, 128>}, {transform_indices = @transform_3, window_bounds = array<i64: 16, 128>}]} {
    %c2_i32 = arith.constant 2 : i32
    %c0_i32 = arith.constant 0 : i32
    %0 = arith.cmpi eq, %c2_i32, %c0_i32 : i32
    %c1_i32 = arith.constant 1 : i32
    %1 = arith.select %0, %c1_i32, %c2_i32 : i32
    %2 = arith.remsi %arg0, %1 : i32
    %c0_i32_0 = arith.constant 0 : i32
    %3 = arith.cmpi ne, %2, %c0_i32_0 : i32
    %c0_i32_1 = arith.constant 0 : i32
    %4 = arith.cmpi slt, %2, %c0_i32_1 : i32
    %c0_i32_2 = arith.constant 0 : i32
    %5 = arith.cmpi slt, %1, %c0_i32_2 : i32
    %6 = arith.xori %4, %5 : i1
    %7 = arith.andi %6, %3 : i1
    %8 = arith.addi %2, %1 : i32
    %9 = arith.select %7, %8, %2 : i32
    %c0_i32_3 = arith.constant 0 : i32
    %10 = arith.cmpi eq, %arg0, %c0_i32_3 : i32
    %11 = arith.extui %10 : i1 to i32
    %c0_i32_4 = arith.constant 0 : i32
    %12 = arith.cmpi ne, %11, %c0_i32_4 : i32
    scf.if %12 {
      %c0_i32_28 = arith.constant 0 : i32
      %c16_i32 = arith.constant 16 : i32
      %68 = arith.addi %c0_i32_28, %c16_i32 : i32
      %c1_i32_29 = arith.constant 1 : i32
      scf.for %arg8 = %c0_i32_28 to %68 step %c1_i32_29  : i32 {
        %c1_i32_31 = arith.constant 1 : i32
        %69 = arith.muli %arg8, %c1_i32_31 : i32
        %c0_i32_32 = arith.constant 0 : i32
        %70 = arith.addi %c0_i32_32, %69 : i32
        %c0_i32_33 = arith.constant 0 : i32
        %71 = arith.addi %c0_i32_33, %70 : i32
        %72 = arith.index_cast %71 : i32 to index
        %73 = memref.load %arg1[%72] : memref<16xi32, #tpu.memory_space<smem>>
        %c0_i32_34 = arith.constant 0 : i32
        %c0_i32_35 = arith.constant 0 : i32
        %c0_i32_36 = arith.constant 0 : i32
        %74 = tpu.memref_slice %arg3[%73, %c0_i32_36] : memref<64x128xf32, #tpu.memory_space<any>> -> memref<1x128xf32, #tpu.memory_space<any>>
        %c0_i32_37 = arith.constant 0 : i32
        %75 = tpu.memref_slice %arg6[%c0_i32_34, %70, %c0_i32_37] : memref<2x16x128xf32, #tpu.memory_space<vmem>> -> memref<1x1x128xf32, #tpu.memory_space<vmem>>
        %76 = tpu.memref_squeeze %75 : memref<1x1x128xf32, #tpu.memory_space<vmem>> -> memref<1x128xf32, #tpu.memory_space<vmem>>
        %77 = tpu.memref_slice %arg7[%c0_i32_35] : memref<2x!tpu.dma_semaphore, #tpu.memory_space<semaphore_mem>> -> memref<1x!tpu.dma_semaphore, #tpu.memory_space<semaphore_mem>>
        %78 = tpu.memref_squeeze %77 : memref<1x!tpu.dma_semaphore, #tpu.memory_space<semaphore_mem>> -> memref<!tpu.dma_semaphore, #tpu.memory_space<semaphore_mem>>
        tpu.enqueue_dma source(%74 : memref<1x128xf32, #tpu.memory_space<any>>) target(%76 : memref<1x128xf32, #tpu.memory_space<vmem>>) target_semaphore(%78 : memref<!tpu.dma_semaphore, #tpu.memory_space<semaphore_mem>>)
      }
      %c16_i32_30 = arith.constant 16 : i32
    } else {
    }
    %c1_i32_5 = arith.constant 1 : i32
    %13 = arith.addi %arg0, %c1_i32_5 : i32
    %c1_i32_6 = arith.constant 1 : i32
    %14 = arith.cmpi slt, %13, %c1_i32_6 : i32
    %15 = arith.extui %14 : i1 to i32
    %c0_i32_7 = arith.constant 0 : i32
    %16 = arith.cmpi ne, %15, %c0_i32_7 : i32
    scf.if %16 {
      %c1_i32_28 = arith.constant 1 : i32
      %68 = arith.addi %arg0, %c1_i32_28 : i32
      %c1_i32_29 = arith.constant 1 : i32
      %69 = arith.addi %arg0, %c1_i32_29 : i32
      %c2_i32_30 = arith.constant 2 : i32
      %c0_i32_31 = arith.constant 0 : i32
      %70 = arith.cmpi eq, %c2_i32_30, %c0_i32_31 : i32
      %c1_i32_32 = arith.constant 1 : i32
      %71 = arith.select %70, %c1_i32_32, %c2_i32_30 : i32
      %72 = arith.remsi %69, %71 : i32
      %c0_i32_33 = arith.constant 0 : i32
      %73 = arith.cmpi ne, %72, %c0_i32_33 : i32
      %c0_i32_34 = arith.constant 0 : i32
      %74 = arith.cmpi slt, %72, %c0_i32_34 : i32
      %c0_i32_35 = arith.constant 0 : i32
      %75 = arith.cmpi slt, %71, %c0_i32_35 : i32
      %76 = arith.xori %74, %75 : i1
      %77 = arith.andi %76, %73 : i1
      %78 = arith.addi %72, %71 : i32
      %79 = arith.select %77, %78, %72 : i32
      %c16_i32 = arith.constant 16 : i32
      %80 = arith.muli %68, %c16_i32 : i32
      %c0_i32_36 = arith.constant 0 : i32
      %c16_i32_37 = arith.constant 16 : i32
      %81 = arith.addi %c0_i32_36, %c16_i32_37 : i32
      %c1_i32_38 = arith.constant 1 : i32
      scf.for %arg8 = %c0_i32_36 to %81 step %c1_i32_38  : i32 {
        %c1_i32_40 = arith.constant 1 : i32
        %82 = arith.muli %arg8, %c1_i32_40 : i32
        %c0_i32_41 = arith.constant 0 : i32
        %83 = arith.addi %c0_i32_41, %82 : i32
        %84 = arith.addi %80, %83 : i32
        %85 = arith.index_cast %84 : i32 to index
        %86 = memref.load %arg1[%85] : memref<16xi32, #tpu.memory_space<smem>>
        %c0_i32_42 = arith.constant 0 : i32
        %87 = tpu.memref_slice %arg3[%86, %c0_i32_42] : memref<64x128xf32, #tpu.memory_space<any>> -> memref<1x128xf32, #tpu.memory_space<any>>
        %c0_i32_43 = arith.constant 0 : i32
        %88 = tpu.memref_slice %arg6[%79, %83, %c0_i32_43] : memref<2x16x128xf32, #tpu.memory_space<vmem>> -> memref<1x1x128xf32, #tpu.memory_space<vmem>>
        %89 = tpu.memref_squeeze %88 : memref<1x1x128xf32, #tpu.memory_space<vmem>> -> memref<1x128xf32, #tpu.memory_space<vmem>>
        %90 = tpu.memref_slice %arg7[%79] : memref<2x!tpu.dma_semaphore, #tpu.memory_space<semaphore_mem>> -> memref<1x!tpu.dma_semaphore, #tpu.memory_space<semaphore_mem>>
        %91 = tpu.memref_squeeze %90 : memref<1x!tpu.dma_semaphore, #tpu.memory_space<semaphore_mem>> -> memref<!tpu.dma_semaphore, #tpu.memory_space<semaphore_mem>>
        tpu.enqueue_dma source(%87 : memref<1x128xf32, #tpu.memory_space<any>>) target(%89 : memref<1x128xf32, #tpu.memory_space<vmem>>) target_semaphore(%91 : memref<!tpu.dma_semaphore, #tpu.memory_space<semaphore_mem>>)
      }
      %c16_i32_39 = arith.constant 16 : i32
    } else {
    }
    %c0_i32_8 = arith.constant 0 : i32
    %c0_i32_9 = arith.constant 0 : i32
    %17 = tpu.memref_slice %arg6[%9, %c0_i32_8, %c0_i32_9] : memref<2x16x128xf32, #tpu.memory_space<vmem>> -> memref<1x16x128xf32, #tpu.memory_space<vmem>>
    %18 = tpu.memref_squeeze %17 : memref<1x16x128xf32, #tpu.memory_space<vmem>> -> memref<16x128xf32, #tpu.memory_space<vmem>>
    %c0_i32_10 = arith.constant 0 : i32
    %c0_i32_11 = arith.constant 0 : i32
    %19 = tpu.memref_slice %arg6[%9, %c0_i32_10, %c0_i32_11] : memref<2x16x128xf32, #tpu.memory_space<vmem>> -> memref<1x16x128xf32, #tpu.memory_space<vmem>>
    %20 = tpu.memref_squeeze %19 : memref<1x16x128xf32, #tpu.memory_space<vmem>> -> memref<16x128xf32, #tpu.memory_space<vmem>>
    %21 = tpu.memref_slice %arg7[%9] : memref<2x!tpu.dma_semaphore, #tpu.memory_space<semaphore_mem>> -> memref<1x!tpu.dma_semaphore, #tpu.memory_space<semaphore_mem>>
    %22 = tpu.memref_squeeze %21 : memref<1x!tpu.dma_semaphore, #tpu.memory_space<semaphore_mem>> -> memref<!tpu.dma_semaphore, #tpu.memory_space<semaphore_mem>>
    tpu.wait_dma2 semaphore(%22 : memref<!tpu.dma_semaphore, #tpu.memory_space<semaphore_mem>>) src(%18 : memref<16x128xf32, #tpu.memory_space<vmem>>) dst(%20 : memref<16x128xf32, #tpu.memory_space<vmem>>)
    %23 = arith.index_cast %9 : i32 to index
    %c0 = arith.constant 0 : index
    %c0_12 = arith.constant 0 : index
    %24 = vector.load %arg6[%23, %c0, %c0_12] : memref<2x16x128xf32, #tpu.memory_space<vmem>>, vector<1x16x128xf32>
    %25 = vector.shape_cast %24 : vector<1x16x128xf32> to vector<16x128xf32>
    %c0_13 = arith.constant 0 : index
    %c0_14 = arith.constant 0 : index
    %26 = vector.load %arg2[%c0_13, %c0_14] : memref<16x1xi32, #tpu.memory_space<vmem>>, vector<16x1xi32>
    %c0_15 = arith.constant 0 : index
    %c0_16 = arith.constant 0 : index
    %27 = vector.load %arg4[%c0_15, %c0_16] : memref<4x128xf32, #tpu.memory_space<vmem>>, vector<1x128xf32>
    %c0_i32_17 = arith.constant 0 : i32
    %28 = vector.broadcast %c0_i32_17 : i32 to vector<16x1xi32>
    %29 = arith.cmpi eq, %26, %28 : vector<16x1xi32>
    %cst = arith.constant 0.000000e+00 : f32
    %30 = vector.shape_cast %29 : vector<16x1xi1> to vector<16x1xi1>
    %31 = vector.broadcast %30 : vector<16x1xi1> to vector<16x128xi1>
    %32 = vector.shape_cast %27 : vector<1x128xf32> to vector<1x128xf32>
    %33 = vector.broadcast %32 : vector<1x128xf32> to vector<16x128xf32>
    %34 = vector.broadcast %cst : f32 to vector<16x128xf32>
    %35 = arith.select %31, %33, %34 : vector<16x128xi1>, vector<16x128xf32>
    %36 = arith.addf %25, %35 : vector<16x128xf32>
    %c1 = arith.constant 1 : index
    %c0_18 = arith.constant 0 : index
    %37 = vector.load %arg4[%c1, %c0_18] : memref<4x128xf32, #tpu.memory_space<vmem>>, vector<1x128xf32>
    %c1_i32_19 = arith.constant 1 : i32
    %38 = vector.broadcast %c1_i32_19 : i32 to vector<16x1xi32>
    %39 = arith.cmpi eq, %26, %38 : vector<16x1xi32>
    %cst_20 = arith.constant 0.000000e+00 : f32
    %40 = vector.shape_cast %39 : vector<16x1xi1> to vector<16x1xi1>
    %41 = vector.broadcast %40 : vector<16x1xi1> to vector<16x128xi1>
    %42 = vector.shape_cast %37 : vector<1x128xf32> to vector<1x128xf32>
    %43 = vector.broadcast %42 : vector<1x128xf32> to vector<16x128xf32>
    %44 = vector.broadcast %cst_20 : f32 to vector<16x128xf32>
    %45 = arith.select %41, %43, %44 : vector<16x128xi1>, vector<16x128xf32>
    %46 = arith.addf %36, %45 : vector<16x128xf32>
    %c2 = arith.constant 2 : index
    %c0_21 = arith.constant 0 : index
    %47 = vector.load %arg4[%c2, %c0_21] : memref<4x128xf32, #tpu.memory_space<vmem>>, vector<1x128xf32>
    %c2_i32_22 = arith.constant 2 : i32
    %48 = vector.broadcast %c2_i32_22 : i32 to vector<16x1xi32>
    %49 = arith.cmpi eq, %26, %48 : vector<16x1xi32>
    %cst_23 = arith.constant 0.000000e+00 : f32
    %50 = vector.shape_cast %49 : vector<16x1xi1> to vector<16x1xi1>
    %51 = vector.broadcast %50 : vector<16x1xi1> to vector<16x128xi1>
    %52 = vector.shape_cast %47 : vector<1x128xf32> to vector<1x128xf32>
    %53 = vector.broadcast %52 : vector<1x128xf32> to vector<16x128xf32>
    %54 = vector.broadcast %cst_23 : f32 to vector<16x128xf32>
    %55 = arith.select %51, %53, %54 : vector<16x128xi1>, vector<16x128xf32>
    %56 = arith.addf %46, %55 : vector<16x128xf32>
    %c3 = arith.constant 3 : index
    %c0_24 = arith.constant 0 : index
    %57 = vector.load %arg4[%c3, %c0_24] : memref<4x128xf32, #tpu.memory_space<vmem>>, vector<1x128xf32>
    %c3_i32 = arith.constant 3 : i32
    %58 = vector.broadcast %c3_i32 : i32 to vector<16x1xi32>
    %59 = arith.cmpi eq, %26, %58 : vector<16x1xi32>
    %cst_25 = arith.constant 0.000000e+00 : f32
    %60 = vector.shape_cast %59 : vector<16x1xi1> to vector<16x1xi1>
    %61 = vector.broadcast %60 : vector<16x1xi1> to vector<16x128xi1>
    %62 = vector.shape_cast %57 : vector<1x128xf32> to vector<1x128xf32>
    %63 = vector.broadcast %62 : vector<1x128xf32> to vector<16x128xf32>
    %64 = vector.broadcast %cst_25 : f32 to vector<16x128xf32>
    %65 = arith.select %61, %63, %64 : vector<16x128xi1>, vector<16x128xf32>
    %66 = arith.addf %56, %65 : vector<16x128xf32>
    %c0_26 = arith.constant 0 : index
    %c0_27 = arith.constant 0 : index
    %67 = vector.load %arg5[%c0_26, %c0_27] : memref<16x128xf32, #tpu.memory_space<vmem>>, vector<16x128xf32>
    tpu.vector_store %arg5[%c0_26, %c0_27], %66 {strides = array<i32>} : memref<16x128xf32, #tpu.memory_space<vmem>>, vector<16x128xf32>,
    return
  }
  func.func @transform_0(%arg0: i32, %arg1: memref<16xi32, #tpu.memory_space<smem>>) -> (i32, i32) {
    %c0_i32 = arith.constant 0 : i32
    %c0_i32_0 = arith.constant 0 : i32
    return %arg0, %c0_i32 : i32, i32
  }
  func.func @transform_2(%arg0: i32, %arg1: memref<16xi32, #tpu.memory_space<smem>>) -> (i32, i32) {
    %c0_i32 = arith.constant 0 : i32
    %c0_i32_0 = arith.constant 0 : i32
    %c0_i32_1 = arith.constant 0 : i32
    return %c0_i32, %c0_i32_0 : i32, i32
  }
  func.func @transform_3(%arg0: i32, %arg1: memref<16xi32, #tpu.memory_space<smem>>) -> (i32, i32) {
    %c0_i32 = arith.constant 0 : i32
    %c0_i32_0 = arith.constant 0 : i32
    return %arg0, %c0_i32 : i32, i32
  }
}

</mosaic_0001>

<llo_original>
// kernel: glm_embedding_1d.1
$region0: #{glm_embedding_1d.1}
  #allocation0 [shape = 'u32[]', space=smem, size = 0x4, offset = 0x4, fixed_abs, tag = 'smem constant byte address 0x4 - core index']
  #allocation1 [shape = 'u32[144,128]{1,0:T(1,128)}', space=vmem, size = 0x12000, scoped, tag = 'internal scratch']
  #allocation2 [shape = 'f32[2,16,128]{2,1,0:T(8,128)}', space=vmem, size = 0x4000, scoped, tag = 'scratch operand']
  #allocation3 [shape = 's32[2]{0}', space=sflag, size = 0x8, scoped, tag = 'scratch operand']
  #allocation4 [shape = 's32[1]{0}', space=sflag, size = 0x4, scoped, tag = 'scoped memory for glm_embedding_1d.1']
  #allocation5 [shape = 'u8[512]{0}', space=smem, size = 0x200, scoped, tag = 'prefetched SMEM operand 0']
  #allocation6 [shape = 's32[]', space=sflag, size = 0x4, offset = 0, fixed_abs, tag = 'sflag constant byte address 0x0 - dummy sync flag']
  #allocation7 [shape = 's32[]', space=sflag, size = 0x4, offset = 0, fixed_abs, tag = 'sflag constant byte address 0x0 - dummy sync flag']
  %s0 = inlined_call_operand.vmem [shape: s32[16], index: 0, kind: input, shape index: {}]
  %s1 = inlined_call_operand.vmem [shape: s32[16,1], index: 1, kind: input, shape index: {}]
  %s2 = inlined_call_operand.vmem [shape: f32[64,128], index: 2, kind: input, shape index: {}]
  %s3 = inlined_call_operand.vmem [shape: f32[4,128], index: 3, kind: input, shape index: {}]
  %s4 = inlined_call_operand.vmem [shape: f32[16,128], index: 4, kind: output, shape index: {}]
  %s5 = sld [smem:[#allocation0]]
  $region100: #{glm_embedding_1d.1} parent=0
    _
  %s7 = ssub.s32 1, %s5
  %s8 = scalar_select 0, %s7, %s5
  %s9 = sshll.u32 %s0, 4
  %s10 = int_to_ptr.vmem [resolvable:$true] %s9
  %12 = dma.vmem_to_smem %s10, 16, [#allocation5], [#allocation4]
  %13 = dma.done [#allocation4], 16
  %14 = sfence
  // Predicated region
  $region2: #{glm_embedding_1d.1} parent=0 // pred_check
    _
  $region3: #{glm_embedding_1d.1} parent=0 // pred_check_branch
    %16 = sbr.rel (0) target = $region5
  $region4: #{glm_embedding_1d.1} parent=0 // pred_region
    _
  $region5: #{glm_embedding_1d.1} parent=0 // pred_fallthru
    _
  // Predicated region
  $region6: #{glm_embedding_1d.1} parent=0 // pred_check
    _
  $region7: #{glm_embedding_1d.1} parent=0 // pred_check_branch
    %18 = sbr.rel (0) target = $region9
  $region8: #{glm_embedding_1d.1} parent=0 // pred_region
    _
  $region9: #{glm_embedding_1d.1} parent=0 // pred_fallthru
    _
  %s19 = ssub.s32 0, 0
  %s20 = ssub.s32 0, 0
  %p21 = scmp.ne.s32.totalorder 0, 0
  %p22 = scmp.lt.s32.totalorder 0, 0
  %p23 = pnand %p22, %p21
  %p24 = pneg %p23
  %s25 = sadd.s32 0, 2
  %s26 = scalar_select %p24, %s25, 0
  %p27 = scmp.eq.s32.totalorder 0, 0
  // Predicated region
  $region10: #{glm_embedding_1d.1} parent=0 // pred_check
    %p28 = pneg %p27
  $region11: #{glm_embedding_1d.1} parent=0 // pred_check_branch
    %30 = sbr.rel (%p28) target = $region13
  $region12: #{glm_embedding_1d.1} parent=0 // pred_region
    loop: start=0, step=1, limit=16
    $region14: #{glm_embedding_1d.1} parent=12 // loop_pre_header
      _
    $region15: #{glm_embedding_1d.1} parent=12 // loop_header
      %s32 = sphi 0, %s36
      %p33 = scmp.ge.s32.totalorder %s32, 16
    $region16: #{glm_embedding_1d.1} parent=12 // loop_header_branch
      %35 = sbr.rel (%p33) target = $region20
    $region17: #{glm_embedding_1d.1} parent=12 // loop_body
      %s37 = sld [smem:[#allocation5 + %s32]]
      %s38 = scalar_lea.vmem %s2, %s37
      %s39 = scalar_lea.vmem [#allocation2], %s32
      %p41 = scmp.lt.u32.totalorder 1, 8
      %p42 = pneg %p41
      // Predicated region
      $region21: #{glm_embedding_1d.1} parent=17 // pred_check
        _
      $region22: #{glm_embedding_1d.1} parent=17 // pred_check_branch
        %44 = sbr.rel (%p41) target = $region24
      $region23: #{glm_embedding_1d.1} parent=17 // pred_region
        %s60 = sand.u32 1, 7
        %p61 = scmp.eq.s32.totalorder %s60, 0
        %p62 = pneg %p61
        // Predicated region
        $region36: #{glm_embedding_1d.1} parent=23 // pred_check
          _
        $region37: #{glm_embedding_1d.1} parent=23 // pred_check_branch
          %64 = sbr.rel (%p61) target = $region39
        $region38: #{glm_embedding_1d.1} parent=23 // pred_region
          %s65 = sand.u32 1, 7
          %s66 = ssub.s32 1, %s65
          %s67 = scalar_lea.vmem %s38, %s66
          %s68 = ssub.s32 1, %s65
          %s69 = scalar_lea.vmem %s39, %s68 [#allocation2]
          %s70 = sshll.u32 1, %s65
          %s71 = ssub.s32 %s70, 1
          loop: start=0, step=1, limit=1
          $region40: #{glm_embedding_1d.1} parent=38 // loop_pre_header
            _
          $region41: #{glm_embedding_1d.1} parent=38 // loop_header
            %s73 = sphi 0, %s77
            %p74 = scmp.ge.s32.totalorder %s73, 1
            %s78 = sphi %s67, %s67
            %s79 = sphi %s69, %s69
          $region42: #{glm_embedding_1d.1} parent=38 // loop_header_branch
            %76 = sbr.rel (%p74) target = $region46
          $region43: #{glm_embedding_1d.1} parent=38 // loop_body
            %v80 = vld [vmem:[%s78] sm:%s71]
            %81 = vst [vmem:[%s79] sm:%s71] %v80
          $region44: #{glm_embedding_1d.1} parent=38 // loop_footer
            %s77 = sadd.s32 1, %s73
          $region45: #{glm_embedding_1d.1} parent=38 // loop_footer_branch
            %72 = sbr.rel target = $region41
          $region46: #{glm_embedding_1d.1} parent=38 // loop_exit
            _
        $region39: #{glm_embedding_1d.1} parent=23 // pred_fallthru
          _
      $region24: #{glm_embedding_1d.1} parent=17 // pred_fallthru
        _
      // Predicated region
      $region25: #{glm_embedding_1d.1} parent=17 // pred_check
        %p45 = pneg %p41
      $region26: #{glm_embedding_1d.1} parent=17 // pred_check_branch
        %47 = sbr.rel (%p45) target = $region28
      $region27: #{glm_embedding_1d.1} parent=17 // pred_region
        %s48 = sshll.u32 1, 1
        %s49 = ssub.s32 %s48, 1
        loop: start=0, step=1, limit=1
        $region29: #{glm_embedding_1d.1} parent=27 // loop_pre_header
          _
        $region30: #{glm_embedding_1d.1} parent=27 // loop_header
          %s51 = sphi 0, %s55
          %p52 = scmp.ge.s32.totalorder %s51, 1
          %s56 = sphi %s38, %s38
          %s57 = sphi %s39, %s39
        $region31: #{glm_embedding_1d.1} parent=27 // loop_header_branch
          %54 = sbr.rel (%p52) target = $region35
        $region32: #{glm_embedding_1d.1} parent=27 // loop_body
          %v58 = vld [vmem:[%s56] sm:%s49]
          %59 = vst [vmem:[%s57] sm:%s49] %v58
        $region33: #{glm_embedding_1d.1} parent=27 // loop_footer
          %s55 = sadd.s32 1, %s51
        $region34: #{glm_embedding_1d.1} parent=27 // loop_footer_branch
          %50 = sbr.rel target = $region30
        $region35: #{glm_embedding_1d.1} parent=27 // loop_exit
          _
      $region28: #{glm_embedding_1d.1} parent=17 // pred_fallthru
        _
      // Predicated region
      $region47: #{glm_embedding_1d.1} parent=17 // pred_check
        _
      $region48: #{glm_embedding_1d.1} parent=17 // pred_check_branch
        %84 = sbr.rel (0) target = $region50
      $region49: #{glm_embedding_1d.1} parent=17 // pred_region
        %85 = vsyncadd [#allocation3], 16
      $region50: #{glm_embedding_1d.1} parent=17 // pred_fallthru
        _
    $region18: #{glm_embedding_1d.1} parent=12 // loop_footer
      %s36 = sadd.s32 1, %s32
    $region19: #{glm_embedding_1d.1} parent=12 // loop_footer_branch
      %31 = sbr.rel target = $region15
    $region20: #{glm_embedding_1d.1} parent=12 // loop_exit
      _
  $region13: #{glm_embedding_1d.1} parent=0 // pred_fallthru
    _
  %s86 = sadd.s32 0, 1
  %p87 = scmp.lt.s32.totalorder %s86, 1
  // Predicated region
  $region51: #{glm_embedding_1d.1} parent=0 // pred_check
    %p88 = pneg %p87
  $region52: #{glm_embedding_1d.1} parent=0 // pred_check_branch
    %90 = sbr.rel (%p88) target = $region54
  $region53: #{glm_embedding_1d.1} parent=0 // pred_region
    %p91 = scmp.lt.s32.totalorder %s86, 0
    %s92 = ssub.s32 0, %s86
    %s93 = scalar_select %p91, %s92, %s86
    %s94 = sand.u32 %s93, 1
    %s95 = ssub.s32 0, %s94
    %s96 = scalar_select %p91, %s95, %s94
    %p97 = scmp.ne.s32.totalorder %s96, 0
    %p98 = scmp.lt.s32.totalorder %s96, 0
    %p99 = pnand %p98, %p97
    %p100 = pneg %p99
    %s101 = sadd.s32 %s96, 2
    %s102 = scalar_select %p100, %s101, %s96
    %s103 = smul.u32 %s86, 16
    loop: start=0, step=1, limit=16
    $region55: #{glm_embedding_1d.1} parent=53 // loop_pre_header
      _
    $region56: #{glm_embedding_1d.1} parent=53 // loop_header
      %s105 = sphi 0, %s109
      %p106 = scmp.ge.s32.totalorder %s105, 16
    $region57: #{glm_embedding_1d.1} parent=53 // loop_header_branch
      %108 = sbr.rel (%p106) target = $region61
    $region58: #{glm_embedding_1d.1} parent=53 // loop_body
      %s110 = sadd.s32 %s103, %s105
      %s111 = sld [smem:[#allocation5 + %s110]]
      %s112 = scalar_lea.vmem %s2, %s111
      %s113 = smul.u32 %s102, 16
      %s114 = sadd.s32 %s105, %s113
      %s115 = scalar_lea.vmem [#allocation2], %s114
      %s116 = scalar_lea.sflag [#allocation3], %s102
      %p118 = scmp.lt.u32.totalorder 1, 8
      %p119 = pneg %p118
      // Predicated region
      $region62: #{glm_embedding_1d.1} parent=58 // pred_check
        _
      $region63: #{glm_embedding_1d.1} parent=58 // pred_check_branch
        %121 = sbr.rel (%p118) target = $region65
      $region64: #{glm_embedding_1d.1} parent=58 // pred_region
        %s137 = sand.u32 1, 7
        %p138 = scmp.eq.s32.totalorder %s137, 0
        %p139 = pneg %p138
        // Predicated region
        $region77: #{glm_embedding_1d.1} parent=64 // pred_check
          _
        $region78: #{glm_embedding_1d.1} parent=64 // pred_check_branch
          %141 = sbr.rel (%p138) target = $region80
        $region79: #{glm_embedding_1d.1} parent=64 // pred_region
          %s142 = sand.u32 1, 7
          %s143 = ssub.s32 1, %s142
          %s144 = scalar_lea.vmem %s112, %s143
          %s145 = ssub.s32 1, %s142
          %s146 = scalar_lea.vmem %s115, %s145 [#allocation2]
          %s147 = sshll.u32 1, %s142
          %s148 = ssub.s32 %s147, 1
          loop: start=0, step=1, limit=1
          $region81: #{glm_embedding_1d.1} parent=79 // loop_pre_header
            _
          $region82: #{glm_embedding_1d.1} parent=79 // loop_header
            %s150 = sphi 0, %s154
            %p151 = scmp.ge.s32.totalorder %s150, 1
            %s155 = sphi %s144, %s144
            %s156 = sphi %s146, %s146
          $region83: #{glm_embedding_1d.1} parent=79 // loop_header_branch
            %153 = sbr.rel (%p151) target = $region87
          $region84: #{glm_embedding_1d.1} parent=79 // loop_body
            %v157 = vld [vmem:[%s155] sm:%s148]
            %158 = vst [vmem:[%s156] sm:%s148] %v157
          $region85: #{glm_embedding_1d.1} parent=79 // loop_footer
            %s154 = sadd.s32 1, %s150
          $region86: #{glm_embedding_1d.1} parent=79 // loop_footer_branch
            %149 = sbr.rel target = $region82
          $region87: #{glm_embedding_1d.1} parent=79 // loop_exit
            _
        $region80: #{glm_embedding_1d.1} parent=64 // pred_fallthru
          _
      $region65: #{glm_embedding_1d.1} parent=58 // pred_fallthru
        _
      // Predicated region
      $region66: #{glm_embedding_1d.1} parent=58 // pred_check
        %p122 = pneg %p118
      $region67: #{glm_embedding_1d.1} parent=58 // pred_check_branch
        %124 = sbr.rel (%p122) target = $region69
      $region68: #{glm_embedding_1d.1} parent=58 // pred_region
        %s125 = sshll.u32 1, 1
        %s126 = ssub.s32 %s125, 1
        loop: start=0, step=1, limit=1
        $region70: #{glm_embedding_1d.1} parent=68 // loop_pre_header
          _
        $region71: #{glm_embedding_1d.1} parent=68 // loop_header
          %s128 = sphi 0, %s132
          %p129 = scmp.ge.s32.totalorder %s128, 1
          %s133 = sphi %s112, %s112
          %s134 = sphi %s115, %s115
        $region72: #{glm_embedding_1d.1} parent=68 // loop_header_branch
          %131 = sbr.rel (%p129) target = $region76
        $region73: #{glm_embedding_1d.1} parent=68 // loop_body
          %v135 = vld [vmem:[%s133] sm:%s126]
          %136 = vst [vmem:[%s134] sm:%s126] %v135
        $region74: #{glm_embedding_1d.1} parent=68 // loop_footer
          %s132 = sadd.s32 1, %s128
        $region75: #{glm_embedding_1d.1} parent=68 // loop_footer_branch
          %127 = sbr.rel target = $region71
        $region76: #{glm_embedding_1d.1} parent=68 // loop_exit
          _
      $region69: #{glm_embedding_1d.1} parent=58 // pred_fallthru
        _
      // Predicated region
      $region88: #{glm_embedding_1d.1} parent=58 // pred_check
        _
      $region89: #{glm_embedding_1d.1} parent=58 // pred_check_branch
        %161 = sbr.rel (0) target = $region91
      $region90: #{glm_embedding_1d.1} parent=58 // pred_region
        %162 = vsyncadd %s116, 16
      $region91: #{glm_embedding_1d.1} parent=58 // pred_fallthru
        _
    $region59: #{glm_embedding_1d.1} parent=53 // loop_footer
      %s109 = sadd.s32 1, %s105
    $region60: #{glm_embedding_1d.1} parent=53 // loop_footer_branch
      %104 = sbr.rel target = $region56
    $region61: #{glm_embedding_1d.1} parent=53 // loop_exit
      _
  $region54: #{glm_embedding_1d.1} parent=0 // pred_fallthru
    _
  %s163 = smul.u32 %s26, 16
  %s164 = scalar_lea.vmem [#allocation2], %s163
  %s165 = scalar_lea.sflag [#allocation3], %s26
  %s166 = smul.u32 16, 1
  %s167 = sshll.u32 %s166, 4
  %168 = dma.done %s165, %s167
  %v169 = vld [vmem:[%s164] sm:$0xff]
  %v170 = vld [vmem:[%s164 + $0x8] sm:$0xff]
  %v171 = vld [vmem:[%s1] sm:$0xff]
  %v172 = vld [vmem:[%s1 + $0x8] sm:$0xff]
  %v173 = vld [vmem:[%s3] sm:$0x1]
  %vm174 = vcmp.eq.s32.totalorder %v171, 0
  %vm175 = vcmp.eq.s32.totalorder %v172, 0
  %v176 = vsel %vm174, 1, 0
  %v177 = vsel %vm175, 1, 0
  %178 = vset.pattern.permute.xlu0 0
  %179 = vperm.xlu0 %178, %v176
  %v180 = vpop.permute.xlu0 %179
  %181 = vset.pattern.permute.xlu0 0
  %182 = vperm.xlu0 %181, %v177
  %v183 = vpop.permute.xlu0 %182
  %vm184 = vcmp.eq.s32.totalorder %v180, 1
  %vm185 = vcmp.eq.s32.totalorder %v183, 1
  %v186 = vlaneseq
  %v187 = vshrl.u32 %v186, 7
  %v188 = vsub.s32 0, %v187
  %v189 = vrot.slane %v173, %v188
  %v190 = vsel %vm184, %v189, 0.0
  %v191 = vsel %vm185, %v189, 0.0
  %v192 = vadd.f32 %v169, %v190
  %v193 = vadd.f32 %v170, %v191
  %v194 = vld [vmem:[%s3 + $0x1] sm:$0x1]
  %vm195 = vcmp.eq.s32.totalorder %v171, 1
  %vm196 = vcmp.eq.s32.totalorder %v172, 1
  %v197 = vsel %vm195, 1, 0
  %v198 = vsel %vm196, 1, 0
  %199 = vset.pattern.permute.xlu0 0
  %200 = vperm.xlu0 %199, %v197
  %v201 = vpop.permute.xlu0 %200
  %202 = vset.pattern.permute.xlu0 0
  %203 = vperm.xlu0 %202, %v198
  %v204 = vpop.permute.xlu0 %203
  %vm205 = vcmp.eq.s32.totalorder %v201, 1
  %vm206 = vcmp.eq.s32.totalorder %v204, 1
  %v207 = vlaneseq
  %v208 = vshrl.u32 %v207, 7
  %v209 = vsub.s32 0, %v208
  %v210 = vrot.slane %v194, %v209
  %v211 = vsel %vm205, %v210, 0.0
  %v212 = vsel %vm206, %v210, 0.0
  %v213 = vadd.f32 %v192, %v211
  %v214 = vadd.f32 %v193, %v212
  %v215 = vld [vmem:[%s3 + $0x2] sm:$0x1]
  %vm216 = vcmp.eq.s32.totalorder %v171, 2
  %vm217 = vcmp.eq.s32.totalorder %v172, 2
  %v218 = vsel %vm216, 1, 0
  %v219 = vsel %vm217, 1, 0
  %220 = vset.pattern.permute.xlu0 0
  %221 = vperm.xlu0 %220, %v218
  %v222 = vpop.permute.xlu0 %221
  %223 = vset.pattern.permute.xlu0 0
  %224 = vperm.xlu0 %223, %v219
  %v225 = vpop.permute.xlu0 %224
  %vm226 = vcmp.eq.s32.totalorder %v222, 1
  %vm227 = vcmp.eq.s32.totalorder %v225, 1
  %v228 = vlaneseq
  %v229 = vshrl.u32 %v228, 7
  %v230 = vsub.s32 0, %v229
  %v231 = vrot.slane %v215, %v230
  %v232 = vsel %vm226, %v231, 0.0
  %v233 = vsel %vm227, %v231, 0.0
  %v234 = vadd.f32 %v213, %v232
  %v235 = vadd.f32 %v214, %v233
  %v236 = vld [vmem:[%s3 + $0x3] sm:$0x1]
  %vm237 = vcmp.eq.s32.totalorder %v171, 3
  %vm238 = vcmp.eq.s32.totalorder %v172, 3
  %v239 = vsel %vm237, 1, 0
  %v240 = vsel %vm238, 1, 0
  %241 = vset.pattern.permute.xlu0 0
  %242 = vperm.xlu0 %241, %v239
  %v243 = vpop.permute.xlu0 %242
  %244 = vset.pattern.permute.xlu0 0
  %245 = vperm.xlu0 %244, %v240
  %v246 = vpop.permute.xlu0 %245
  %vm247 = vcmp.eq.s32.totalorder %v243, 1
  %vm248 = vcmp.eq.s32.totalorder %v246, 1
  %v249 = vlaneseq
  %v250 = vshrl.u32 %v249, 7
  %v251 = vsub.s32 0, %v250
  %v252 = vrot.slane %v236, %v251
  %v253 = vsel %vm247, %v252, 0.0
  %v254 = vsel %vm248, %v252, 0.0
  %v255 = vadd.f32 %v234, %v253
  %v256 = vadd.f32 %v235, %v254
  %257 = vst [vmem:[%s4] sm:$0xff] %v255
  %258 = vst [vmem:[%s4 + $0x8] sm:$0xff] %v256
  // Predicated region
  $region92: #{glm_embedding_1d.1} parent=0 // pred_check
    _
  $region93: #{glm_embedding_1d.1} parent=0 // pred_check_branch
    %260 = sbr.rel (0) target = $region95
  $region94: #{glm_embedding_1d.1} parent=0 // pred_region
    _
  $region95: #{glm_embedding_1d.1} parent=0 // pred_fallthru
    _
  // Predicated region
  $region96: #{glm_embedding_1d.1} parent=0 // pred_check
    _
  $region97: #{glm_embedding_1d.1} parent=0 // pred_check_branch
    %262 = sbr.rel (0) target = $region99
  $region98: #{glm_embedding_1d.1} parent=0 // pred_region
    _
  $region99: #{glm_embedding_1d.1} parent=0 // pred_fallthru
    _
  %263 = vsyncmov [#allocation3]
  %s264 = vpop.sfrf %263
  %p265 = scmp.eq.s32.totalorder %s264, 0
  %p266 = pneg %p265
  %268 = shalt.err (%p266)
  %s269 = scalar_lea.sflag [#allocation3], 1
  %270 = vsyncmov %s269
  %s271 = vpop.sfrf %270
  %p272 = scmp.eq.s32.totalorder %s271, 0
  %p273 = pneg %p272
  %275 = shalt.err (%p273)

</llo_original>
